<compile_context>
chip_gen: v7x
topology: tpu7x:2x2x1
jax: 0.10.0
libtpu: 0.0.40
codegen_flags: <defaults>
</compile_context>

<pallas_src>
import jax
import jax.numpy as jnp
from jax.experimental import pallas as pl
from jax.experimental.pallas import tpu as pltpu


def _round_up(x, m):
    return ((x + m - 1) // m) * m


def _prefix_mlp_kernel(x_ref, w1_ref, b1_ref, w2_ref, b2_ref, o_ref, h_ref):
    # First linear + tanh: computed only on the first N tile of each M tile,
    # cached in VMEM scratch (in the W2 matmul dtype) and reused across all
    # N tiles of that M tile.
    @pl.when(pl.program_id(1) == 0)
    def _():
        h_f32 = jnp.tanh(
            jnp.dot(
                x_ref[...].astype(w1_ref.dtype),
                w1_ref[...],
                preferred_element_type=jnp.float32,
            )
            + b1_ref[...]
        )
        h_ref[...] = h_f32.astype(h_ref.dtype)

    # Second linear on the current (H, tn) slice of W2 (f32 accumulate).
    o_ref[...] = (
        jnp.dot(
            h_ref[...],
            w2_ref[...],
            preferred_element_type=jnp.float32,
        )
        + b2_ref[...]
    ).astype(o_ref.dtype)


def _pick_tn(N, H, tm, w_itemsize, x_itemsize, budget_bytes=12 * 1024 * 1024):
    """Largest lane-dense N tile whose double-buffered working set fits budget."""
    per_128 = 2 * (H * 128 * w_itemsize + 128 * 4 + tm * 128 * x_itemsize)
    max_tiles = max(1, budget_bytes // max(per_128, 1))
    tn = min(_round_up(N, 128), int(max_tiles) * 128, 4096)
    return max(128, tn)


def prefix_mlp(x, w1, b1, w2, b2, *, tm=None, tn=None):
    """x: [M, K]; returns [M, N] = tanh(x @ w1 + b1) @ w2 + b2 (f32 accumulate)."""
    M, K = x.shape
    K2, H = w1.shape
    H2, N = w2.shape
    assert K2 == K and H2 == H

    b1 = b1.reshape(1, H).astype(jnp.float32)
    b2 = b2.reshape(1, N).astype(jnp.float32)

    wbytes = jnp.dtype(w1.dtype).itemsize
    xbytes = jnp.dtype(x.dtype).itemsize

    # M = batch*prefix_len is small: usually a single sublane-aligned block.
    if tm is None:
        tm = min(_round_up(M, 8), 128)
    # Stream the huge N dim in the largest lane-dense tile that fits VMEM.
    if tn is None:
        tn = _pick_tn(N, H, tm, wbytes, xbytes)

    # Zero-pad M to the tile boundary so ragged tiles never read garbage.
    M_pad = _round_up(M, tm)
    if M_pad != M:
        x = jnp.pad(x, ((0, M_pad - M), (0, 0)))

    grid = (M_pad // tm, pl.cdiv(N, tn))

    # VMEM budget: double-buffered inputs/outputs + the h scratch, with headroom.
    est = (
        2 * (tm * K * xbytes + K * H * wbytes + H * 4
             + H * tn * wbytes + tn * 4 + tm * tn * xbytes)
        + tm * H * wbytes
    )
    vmem_limit = min(max(int(est * 1.5), 16 * 1024 * 1024), 48 * 1024 * 1024)

    out = pl.pallas_call(
        _prefix_mlp_kernel,
        out_shape=jax.ShapeDtypeStruct((M_pad, N), x.dtype),
        grid_spec=pltpu.PrefetchScalarGridSpec(
            num_scalar_prefetch=0,
            grid=grid,
            in_specs=[
                pl.BlockSpec((tm, K), lambda i, j: (i, 0)),  # activation tile
                pl.BlockSpec((K, H), lambda i, j: (0, 0)),   # W1 (resident)
                pl.BlockSpec((1, H), lambda i, j: (0, 0)),   # b1
                pl.BlockSpec((H, tn), lambda i, j: (0, j)),  # W2 tile (streamed)
                pl.BlockSpec((1, tn), lambda i, j: (0, j)),  # b2 tile
            ],
            out_specs=pl.BlockSpec((tm, tn), lambda i, j: (i, j)),
            scratch_shapes=[pltpu.VMEM((tm, H), w2.dtype)],  # cached tanh(h)
        ),
        compiler_params=pltpu.CompilerParams(
            dimension_semantics=("parallel", "arbitrary"),
            vmem_limit_bytes=vmem_limit,
        ),
    )(x, w1, b1, w2, b2)

    if M_pad != M:
        out = out[:M]
    return out


class PrefixEncoderPallas:
    """JAX/Pallas re-implementation of the torch PrefixEncoder forward pass."""

    def __init__(self, *, pre_seq_len, hidden_size, prefix_hidden_size,
                 num_hidden_layers, prefix_projection, key,
                 weight_dtype=jnp.float32):
        self.prefix_projection = prefix_projection
        out_dim = num_hidden_layers * 2 * hidden_size
        k0, k1, k2, k3, k4 = jax.random.split(key, 5)
        if prefix_projection:
            self.embedding = jax.random.normal(
                k0, (pre_seq_len, hidden_size), jnp.float32) * 0.02
            # Stored pre-transposed as (in, out) for the kernel layout.
            self.w1 = (jax.random.normal(
                k1, (hidden_size, prefix_hidden_size), jnp.float32) * 0.02
            ).astype(weight_dtype)
            self.b1 = jax.random.normal(k2, (prefix_hidden_size,), jnp.float32) * 0.02
            self.w2 = (jax.random.normal(
                k3, (prefix_hidden_size, out_dim), jnp.float32) * 0.02
            ).astype(weight_dtype)
            self.b2 = jax.random.normal(k4, (out_dim,), jnp.float32) * 0.02
        else:
            self.embedding = jax.random.normal(
                k0, (pre_seq_len, out_dim), jnp.float32) * 0.02

    def __call__(self, prefix):
        # prefix: int32 [batch, prefix_len]
        B, P = prefix.shape
        if self.prefix_projection:
            # Embedding gather (pure index lookup) stays in plain JAX glue.
            # TODO(synk): the gather could be fused via num_scalar_prefetch=1 +
            # pl.Element row index_map; skipped because the token slab is tiny
            # compared with the dominant W2 HBM stream.
            tokens = jnp.take(self.embedding, prefix.reshape(-1), axis=0)  # [B*P, K]
            out = prefix_mlp(tokens, self.w1, self.b1, self.w2, self.b2)   # [B*P, N]
            return out.reshape(B, P, -1)
        else:
            return jnp.take(self.embedding, prefix.reshape(-1), axis=0).reshape(B, P, -1)


if __name__ == "__main__":
    # Small config: batch=2, prefix_len=8, pre_seq_len=8, hidden=32,
    # prefix_hidden=32, num_hidden_layers=2 -> out_dim = 2*2*32 = 128.
    key = jax.random.PRNGKey(0)
    kp, km = jax.random.split(key)

    B, P = 2, 8
    pre_seq_len, hidden, prefix_hidden, layers = 8, 32, 32, 2
    out_dim = 2 * layers * hidden

    prefix = jax.random.randint(kp, (B, P), 0, pre_seq_len, dtype=jnp.int32)

    # ---- f32 weights: tight numeric check against a pure-JAX reference. ----
    enc = PrefixEncoderPallas(
        pre_seq_len=pre_seq_len, hidden_size=hidden,
        prefix_hidden_size=prefix_hidden, num_hidden_layers=layers,
        prefix_projection=True, key=km, weight_dtype=jnp.float32)
    out = jax.block_until_ready(enc(prefix))

    tokens = jnp.take(enc.embedding, prefix.reshape(-1), axis=0)
    ref = (jnp.tanh(tokens @ enc.w1 + enc.b1) @ enc.w2 + enc.b2).reshape(B, P, -1)
    assert out.shape == (B, P, out_dim), out.shape
    assert jnp.allclose(out, ref, atol=1e-5, rtol=1e-5)

    # ---- bf16 weights (bandwidth optimization): looser numeric check. ----
    enc_bf = PrefixEncoderPallas(
        pre_seq_len=pre_seq_len, hidden_size=hidden,
        prefix_hidden_size=prefix_hidden, num_hidden_layers=layers,
        prefix_projection=True, key=km, weight_dtype=jnp.bfloat16)
    out_bf = jax.block_until_ready(enc_bf(prefix))
    ref_bf = (jnp.tanh(tokens @ enc_bf.w1.astype(jnp.float32) + enc_bf.b1)
              @ enc_bf.w2.astype(jnp.float32) + enc_bf.b2).reshape(B, P, -1)
    assert out_bf.shape == (B, P, out_dim), out_bf.shape
    assert jnp.allclose(out_bf, ref_bf, atol=5e-3, rtol=5e-3)

    # ---- ragged-M check (batch*prefix_len not a multiple of 8). ----
    prefix_rag = jax.random.randint(kp, (3, 5), 0, pre_seq_len, dtype=jnp.int32)
    out_rag = jax.block_until_ready(enc(prefix_rag))
    tok_rag = jnp.take(enc.embedding, prefix_rag.reshape(-1), axis=0)
    ref_rag = (jnp.tanh(tok_rag @ enc.w1 + enc.b1) @ enc.w2 + enc.b2).reshape(3, 5, -1)
    assert out_rag.shape == (3, 5, out_dim), out_rag.shape
    assert jnp.allclose(out_rag, ref_rag, atol=1e-5, rtol=1e-5)

    # ---- prefix_projection=False branch (plain embedding gather, no kernel). ----
    enc_np = PrefixEncoderPallas(
        pre_seq_len=pre_seq_len, hidden_size=hidden,
        prefix_hidden_size=prefix_hidden, num_hidden_layers=layers,
        prefix_projection=False, key=km)
    out_np = jax.block_until_ready(enc_np(prefix))
    assert out_np.shape == (B, P, out_dim), out_np.shape

    print("KERNEL_OK")
</pallas_src>

<mosaic_0001>
module attributes {stable_mosaic.version = 11 : i64} {
  func.func @_prefix_mlp_kernel(%arg0: i32, %arg1: i32, %arg2: memref<16x32xf32, #tpu.memory_space<vmem>>, %arg3: memref<32x32xf32, #tpu.memory_space<vmem>>, %arg4: memref<1x32xf32, #tpu.memory_space<vmem>>, %arg5: memref<32x128xf32, #tpu.memory_space<vmem>>, %arg6: memref<1x128xf32, #tpu.memory_space<vmem>>, %arg7: memref<16x128xf32, #tpu.memory_space<vmem>>, %arg8: memref<16x32xf32, #tpu.memory_space<vmem>>) attributes {dimension_semantics = [#tpu.dimension_semantics<parallel>, #tpu.dimension_semantics<arbitrary>], iteration_bounds = array<i64: 1, 1>, scalar_prefetch = 0 : i64, scratch_operands = 1 : i64, tpu.core_type = #tpu.core_type<tc>, window_params = [{transform_indices = @transform_0, window_bounds = array<i64: 16, 32>}, {pipeline_mode = #tpu.pipeline_mode<synchronous>, transform_indices = @transform_1, window_bounds = array<i64: 32, 32>}, {pipeline_mode = #tpu.pipeline_mode<synchronous>, transform_indices = @transform_2, window_bounds = array<i64: 1, 32>}, {transform_indices = @transform_3, window_bounds = array<i64: 32, 128>}, {transform_indices = @transform_4, window_bounds = array<i64: 1, 128>}, {transform_indices = @transform_5, window_bounds = array<i64: 16, 128>}]} {
    %c0_i32 = arith.constant 0 : i32
    %0 = arith.cmpi eq, %arg1, %c0_i32 : i32
    %1 = arith.extui %0 : i1 to i32
    %c0_i32_0 = arith.constant 0 : i32
    %2 = arith.cmpi ne, %1, %c0_i32_0 : i32
    scf.if %2 {
      %c0_8 = arith.constant 0 : index
      %c0_9 = arith.constant 0 : index
      %10 = vector.load %arg2[%c0_8, %c0_9] : memref<16x32xf32, #tpu.memory_space<vmem>>, vector<16x32xf32>
      %c0_10 = arith.constant 0 : index
      %c0_11 = arith.constant 0 : index
      %11 = vector.load %arg3[%c0_10, %c0_11] : memref<32x32xf32, #tpu.memory_space<vmem>>, vector<32x32xf32>
      %cst_12 = arith.constant dense<0.000000e+00> : vector<16x32xf32>
      %12 = tpu.matmul %10, %11, %cst_12 {dimension_numbers = #tpu.dot_dimension_numbers<[1], [0], [0], [1], [0, 0, 1, 1], [], []>} : vector<16x32xf32>, vector<32x32xf32>, vector<16x32xf32> -> vector<16x32xf32>
      %c0_13 = arith.constant 0 : index
      %c0_14 = arith.constant 0 : index
      %13 = vector.load %arg4[%c0_13, %c0_14] : memref<1x32xf32, #tpu.memory_space<vmem>>, vector<1x32xf32>
      %14 = vector.broadcast %13 : vector<1x32xf32> to vector<16x32xf32>
      %15 = arith.addf %12, %14 : vector<16x32xf32>
      %16 = math.tanh %15 : vector<16x32xf32>
      %c0_15 = arith.constant 0 : index
      %c0_16 = arith.constant 0 : index
      %17 = vector.load %arg8[%c0_15, %c0_16] : memref<16x32xf32, #tpu.memory_space<vmem>>, vector<16x32xf32>
      tpu.vector_store %arg8[%c0_15, %c0_16], %16 {strides = array<i32>} : memref<16x32xf32, #tpu.memory_space<vmem>>, vector<16x32xf32>,
    } else {
    }
    %c0 = arith.constant 0 : index
    %c0_1 = arith.constant 0 : index
    %3 = vector.load %arg8[%c0, %c0_1] : memref<16x32xf32, #tpu.memory_space<vmem>>, vector<16x32xf32>
    %c0_2 = arith.constant 0 : index
    %c0_3 = arith.constant 0 : index
    %4 = vector.load %arg5[%c0_2, %c0_3] : memref<32x128xf32, #tpu.memory_space<vmem>>, vector<32x128xf32>
    %cst = arith.constant dense<0.000000e+00> : vector<16x128xf32>
    %5 = tpu.matmul %3, %4, %cst {dimension_numbers = #tpu.dot_dimension_numbers<[1], [0], [0], [1], [0, 0, 1, 1], [], []>} : vector<16x32xf32>, vector<32x128xf32>, vector<16x128xf32> -> vector<16x128xf32>
    %c0_4 = arith.constant 0 : index
    %c0_5 = arith.constant 0 : index
    %6 = vector.load %arg6[%c0_4, %c0_5] : memref<1x128xf32, #tpu.memory_space<vmem>>, vector<1x128xf32>
    %7 = vector.broadcast %6 : vector<1x128xf32> to vector<16x128xf32>
    %8 = arith.addf %5, %7 : vector<16x128xf32>
    %c0_6 = arith.constant 0 : index
    %c0_7 = arith.constant 0 : index
    %9 = vector.load %arg7[%c0_6, %c0_7] : memref<16x128xf32, #tpu.memory_space<vmem>>, vector<16x128xf32>
    tpu.vector_store %arg7[%c0_6, %c0_7], %8 {strides = array<i32>} : memref<16x128xf32, #tpu.memory_space<vmem>>, vector<16x128xf32>,
    return
  }
  func.func @transform_0(%arg0: i32, %arg1: i32) -> (i32, i32) {
    %c0_i32 = arith.constant 0 : i32
    %c0_i32_0 = arith.constant 0 : i32
    return %arg0, %c0_i32 : i32, i32
  }
  func.func @transform_1(%arg0: i32, %arg1: i32) -> (i32, i32) {
    %c0_i32 = arith.constant 0 : i32
    %c0_i32_0 = arith.constant 0 : i32
    %c0_i32_1 = arith.constant 0 : i32
    return %c0_i32, %c0_i32_0 : i32, i32
  }
  func.func @transform_2(%arg0: i32, %arg1: i32) -> (i32, i32) {
    %c0_i32 = arith.constant 0 : i32
    %c0_i32_0 = arith.constant 0 : i32
    %c0_i32_1 = arith.constant 0 : i32
    return %c0_i32, %c0_i32_0 : i32, i32
  }
  func.func @transform_3(%arg0: i32, %arg1: i32) -> (i32, i32) {
    %c0_i32 = arith.constant 0 : i32
    %c0_i32_0 = arith.constant 0 : i32
    return %c0_i32, %arg1 : i32, i32
  }
  func.func @transform_4(%arg0: i32, %arg1: i32) -> (i32, i32) {
    %c0_i32 = arith.constant 0 : i32
    %c0_i32_0 = arith.constant 0 : i32
    return %c0_i32, %arg1 : i32, i32
  }
  func.func @transform_5(%arg0: i32, %arg1: i32) -> (i32, i32) {
    %c0_i32 = arith.constant 0 : i32
    return %arg0, %arg1 : i32, i32
  }
}

</mosaic_0001>

<llo_original>
// kernel: tpu_custom_call.1
$region0: #{tpu_custom_call.1}
  #allocation0 [shape = 'u32[]', space=smem, size = 0x4, offset = 0x4, fixed_abs, tag = 'smem constant byte address 0x4 - core index']
  #allocation1 [shape = 'u32[144,128]{1,0:T(1,128)}', space=vmem, size = 0x12000, scoped, tag = 'internal scratch']
  #allocation2 [shape = 'f32[16,32]{1,0:T(8,128)}', space=vmem, size = 0x2000, scoped, tag = 'scratch operand']
  %s0 = inlined_call_operand.hbm [shape: f32[16,32], index: 0, kind: input, shape index: {}]
  %s1 = inlined_call_operand.hbm [shape: f32[32,32], index: 1, kind: input, shape index: {}]
  %s2 = inlined_call_operand.vmem [shape: f32[1,32], index: 2, kind: input, shape index: {}]
  %s3 = inlined_call_operand.hbm [shape: f32[32,128], index: 3, kind: input, shape index: {}]
  %s4 = inlined_call_operand.vmem [shape: f32[1,128], index: 4, kind: input, shape index: {}]
  %s5 = inlined_call_operand.hbm [shape: f32[16,128], index: 5, kind: output, shape index: {}]
  %s6 = sld [smem:[#allocation0]]
  $region46: #{tpu_custom_call.1} parent=0
    _
  %s8 = ssub.s32 1, %s6
  %s9 = scalar_select 0, %s8, %s6
  $region1: #{tpu_custom_call.1} parent=0
    #allocation3 [shape = 'u8[8192]{0}', space=vmem, size = 0x2000, scoped, tag = 'input window, operand 0, single buffered']
    #allocation4 [shape = 's32[1]{0}', space=sflag, size = 0x4, scoped, tag = 'scoped memory for tpu_custom_call.1']
    #allocation5 [shape = 's32[1]{0}', space=sflag, size = 0x4, scoped, tag = 'scoped memory for tpu_custom_call.1']
    #allocation6 [shape = 'u8[16384]{0}', space=vmem, size = 0x4000, scoped, tag = 'input window, operand 1, single buffered']
    #allocation7 [shape = 's32[1]{0}', space=sflag, size = 0x4, scoped, tag = 'scoped memory for tpu_custom_call.1']
    #allocation8 [shape = 'u8[16384]{0}', space=vmem, size = 0x4000, scoped, tag = 'input window, operand 3, single buffered']
    #allocation9 [shape = 'u8[8192]{0}', space=vmem, size = 0x2000, scoped, tag = 'output window, operand 0, single buffered']
    %10 = vsyncpa [#allocation4], 0
    %11 = vsyncpa [#allocation7], 0
    %12 = vsyncpa [#allocation5], 0
    // Predicated region
    $region2: #{tpu_custom_call.1} parent=1 // pred_check
      _
    $region3: #{tpu_custom_call.1} parent=1 // pred_check_branch
      %14 = sbr.rel (0) target = $region5
    $region4: #{tpu_custom_call.1} parent=1 // pred_region
      %s16 = ssub.s32 256, 256
      %17 = vsyncadd [#allocation4], %s16
      %s18 = sshll.u32 [#allocation3], 4
      %s19 = int_to_ptr.vmem [resolvable:$true] %s18
      %24 = dma.hbm_to_vmem [thread:$0]  %s0, 256, %s19, [#allocation4], 128, 128, 8
    $region5: #{tpu_custom_call.1} parent=1 // pred_fallthru
      _
    // Predicated region
    $region6: #{tpu_custom_call.1} parent=1 // pred_check
      _
    $region7: #{tpu_custom_call.1} parent=1 // pred_check_branch
      %26 = sbr.rel (0) target = $region9
    $region8: #{tpu_custom_call.1} parent=1 // pred_region
      %s28 = ssub.s32 512, 512
      %29 = vsyncadd [#allocation7], %s28
      %s30 = sshll.u32 [#allocation6], 4
      %s31 = int_to_ptr.vmem [resolvable:$true] %s30
      %36 = dma.hbm_to_vmem [thread:$0]  %s1, 512, %s31, [#allocation7], 128, 128, 8
    $region9: #{tpu_custom_call.1} parent=1 // pred_fallthru
      _
    // Predicated region
    $region10: #{tpu_custom_call.1} parent=1 // pred_check
      _
    $region11: #{tpu_custom_call.1} parent=1 // pred_check_branch
      %38 = sbr.rel (0) target = $region13
    $region12: #{tpu_custom_call.1} parent=1 // pred_region
      _
    $region13: #{tpu_custom_call.1} parent=1 // pred_fallthru
      _
    // Predicated region
    $region14: #{tpu_custom_call.1} parent=1 // pred_check
      _
    $region15: #{tpu_custom_call.1} parent=1 // pred_check_branch
      %40 = sbr.rel (0) target = $region17
    $region16: #{tpu_custom_call.1} parent=1 // pred_region
      %s42 = ssub.s32 512, 512
      %43 = vsyncadd [#allocation7], %s42
      %s44 = sshll.u32 [#allocation8], 4
      %s45 = int_to_ptr.vmem [resolvable:$true] %s44
      %50 = dma.hbm_to_vmem [thread:$0]  %s3, 512, %s45, [#allocation7], 128, 128, 8
    $region17: #{tpu_custom_call.1} parent=1 // pred_fallthru
      _
    // Predicated region
    $region18: #{tpu_custom_call.1} parent=1 // pred_check
      _
    $region19: #{tpu_custom_call.1} parent=1 // pred_check_branch
      %52 = sbr.rel (0) target = $region21
    $region20: #{tpu_custom_call.1} parent=1 // pred_region
      _
    $region21: #{tpu_custom_call.1} parent=1 // pred_fallthru
      _
    // Predicated region
    $region22: #{tpu_custom_call.1} parent=1 // pred_check
      _
    $region23: #{tpu_custom_call.1} parent=1 // pred_check_branch
      %54 = sbr.rel (0) target = $region25
    $region24: #{tpu_custom_call.1} parent=1 // pred_region
      %55 = dma.done [#allocation4], 256
    $region25: #{tpu_custom_call.1} parent=1 // pred_fallthru
      _
    // Predicated region
    $region26: #{tpu_custom_call.1} parent=1 // pred_check
      _
    $region27: #{tpu_custom_call.1} parent=1 // pred_check_branch
      %57 = sbr.rel (0) target = $region29
    $region28: #{tpu_custom_call.1} parent=1 // pred_region
      %58 = dma.done [#allocation7], 512
    $region29: #{tpu_custom_call.1} parent=1 // pred_fallthru
      _
    // Predicated region
    $region30: #{tpu_custom_call.1} parent=1 // pred_check
      _
    $region31: #{tpu_custom_call.1} parent=1 // pred_check_branch
      %60 = sbr.rel (0) target = $region33
    $region32: #{tpu_custom_call.1} parent=1 // pred_region
      %61 = dma.done [#allocation7], 512
    $region33: #{tpu_custom_call.1} parent=1 // pred_fallthru
      _
    %p62 = scmp.eq.s32.totalorder 0, 0
    // Predicated region
    $region34: #{tpu_custom_call.1} parent=1 // pred_check
      %p63 = pneg %p62
    $region35: #{tpu_custom_call.1} parent=1 // pred_check_branch
      %65 = sbr.rel (%p63) target = $region37
    $region36: #{tpu_custom_call.1} parent=1 // pred_region
      %v66 = vld [vmem:[#allocation3] sm:$0xff]
      %v67 = vld [vmem:[#allocation3 + $0x8] sm:$0xff]
      %v68 = vld [vmem:[#allocation6] sm:$0xff]
      %v69 = vld [vmem:[#allocation6 + $0x8] sm:$0xff]
      %v70 = vld [vmem:[#allocation6 + $0x10] sm:$0xff]
      %v71 = vld [vmem:[#allocation6 + $0x18] sm:$0xff]
      %v72 = vld [vmem:[%s2] sm:$0x1]
      %v74 = vlaneseq
      %v75 = vshrl.u32 %v74, 7
      %v76 = vsub.s32 0, %v75
      %v77 = vrot.slane %v72, %v76
      %vm79 = vcmask 261120
      %v81 = vsel %vm79, %v66, 0
      %v84 = vsel %vm79, %v67, 0
      %86 = vmatprep.subr.mxu0 0.0
      %87 = vmatpush1.msra.mxu0 %v68
      %88 = vmatprep.subr.mxu0 0.0
      %89 = vmatpush1.msra.mxu0 %v69
      %90 = vmatprep.subr.mxu0 0.0
      %91 = vmatpush1.msra.mxu0 %v70
      %92 = vmatprep.subr.mxu0 0.0
      %93 = vmatpush1.msra.mxu0 %v71
      %94 = vmatprep.subr.mxu0 0.0
      %95 = vmatpush1.msra.mxu0 0.0
      %96 = vmatprep.subr.mxu0 0.0
      %97 = vmatpush1.msra.mxu0 0.0
      %98 = vmatprep.subr.mxu0 0.0
      %99 = vmatpush1.msra.mxu0 0.0
      %100 = vmatprep.subr.mxu0 0.0
      %101 = vmatpush1.msra.mxu0 0.0
      %102 = vmatprep.subr.mxu0 0.0
      %103 = vmatpush1.msra.mxu0 0.0
      %104 = vmatprep.subr.mxu0 0.0
      %105 = vmatpush1.msra.mxu0 0.0
      %106 = vmatprep.subr.mxu0 0.0
      %107 = vmatpush1.msra.mxu0 0.0
      %108 = vmatprep.subr.mxu0 0.0
      %109 = vmatpush1.msra.mxu0 0.0
      %110 = vmatprep.subr.mxu0 0.0
      %111 = vmatpush1.msra.mxu0 0.0
      %112 = vmatprep.subr.mxu0 0.0
      %113 = vmatpush1.msra.mxu0 0.0
      %114 = vmatprep.subr.mxu0 0.0
      %115 = vmatpush1.msra.mxu0 0.0
      %116 = vmatprep.subr.mxu0 0.0
      %117 = vmatpush1.msra.mxu0 0.0
      %118 = vmatprep.subr.mxu0 0.0
      %119 = vmatpush1.msra.mxu0 0.0
      %120 = vmatprep.subr.mxu0 0.0
      %121 = vmatpush1.msra.mxu0 0.0
      %122 = vmatprep.subr.mxu0 0.0
      %123 = vmatpush1.msra.mxu0 0.0
      %124 = vmatprep.subr.mxu0 0.0
      %125 = vmatpush1.msra.mxu0 0.0
      %126 = vmatprep.subr.mxu0 0.0
      %127 = vmatpush1.msra.mxu0 0.0
      %128 = vmatprep.subr.mxu0 0.0
      %129 = vmatpush1.msra.mxu0 0.0
      %130 = vmatprep.subr.mxu0 0.0
      %131 = vmatpush1.msra.mxu0 0.0
      %132 = vmatprep.subr.mxu0 0.0
      %133 = vmatpush1.msra.mxu0 0.0
      %134 = vmatprep.subr.mxu0 0.0
      %135 = vmatpush1.msra.mxu0 0.0
      %136 = vmatprep.subr.mxu0 0.0
      %137 = vmatpush1.msra.mxu0 0.0
      %138 = vmatprep.subr.mxu0 0.0
      %139 = vmatpush1.msra.mxu0 0.0
      %140 = vmatprep.subr.mxu0 0.0
      %141 = vmatpush1.msra.mxu0 0.0
      %142 = vmatprep.subr.mxu0 0.0
      %143 = vmatpush1.msra.mxu0 0.0
      %144 = vmatprep.subr.mxu0 0.0
      %145 = vmatpush1.msra.mxu0 0.0
      %146 = vmatprep.subr.mxu0 0.0
      %147 = vmatpush1.msra.mxu0 0.0
      %148 = vmatprep.subr.mxu0 0.0
      %149 = vmatpush1.msra.mxu0 0.0
      %150 = vmatprep.mubr.f32.mxu0 0.0
      %151 = vmatmul.mubr.f32.gmra.mrb[0].mxu0 %v81
      %v152 = vpop.f32.mrb[0].mxu0
      %v153 = vadd.f32 %v77, %v152
      %v154 = vpop.f32.mrb[0].mxu0
      %155 = vmatprep.mubr.f32.mxu0 0.0
      %156 = vmatmul.mubr.f32.gmra.mrb[0].mxu0 %v84
      %v157 = vpop.f32.mrb[0].mxu0
      %v158 = vadd.f32 %v77, %v157
      %v159 = vpop.f32.mrb[0].mxu0
      %160 = vdwg.mxu0
      %v161 = vtanh.pop %v153
      %v162 = vtanh.pop %v158
      %163 = vst.msk [vmem:[#allocation2] sm:$0xff] %vm79, %v161
      %164 = vst.msk [vmem:[#allocation2 + $0x8] sm:$0xff] %vm79, %v162
    $region37: #{tpu_custom_call.1} parent=1 // pred_fallthru
      _
    %v165 = vld [vmem:[#allocation2] sm:$0xff]
    %v166 = vld [vmem:[#allocation2 + $0x8] sm:$0xff]
    %v167 = vld [vmem:[#allocation8] sm:$0xff]
    %v168 = vld [vmem:[#allocation8 + $0x8] sm:$0xff]
    %v169 = vld [vmem:[#allocation8 + $0x10] sm:$0xff]
    %v170 = vld [vmem:[#allocation8 + $0x18] sm:$0xff]
    %v171 = vld [vmem:[%s4] sm:$0x1]
    %v173 = vlaneseq
    %v174 = vshrl.u32 %v173, 7
    %v175 = vsub.s32 0, %v174
    %v176 = vrot.slane %v171, %v175
    %vm178 = vcmask 261120
    %v180 = vsel %vm178, %v165, 0
    %v183 = vsel %vm178, %v166, 0
    %185 = vmatprep.subr.mxu0 0.0
    %186 = vmatpush1.msra.mxu0 %v167
    %187 = vmatprep.subr.mxu0 0.0
    %188 = vmatpush1.msra.mxu0 %v168
    %189 = vmatprep.subr.mxu0 0.0
    %190 = vmatpush1.msra.mxu0 %v169
    %191 = vmatprep.subr.mxu0 0.0
    %192 = vmatpush1.msra.mxu0 %v170
    %193 = vmatprep.subr.mxu0 0.0
    %194 = vmatpush1.msra.mxu0 0.0
    %195 = vmatprep.subr.mxu0 0.0
    %196 = vmatpush1.msra.mxu0 0.0
    %197 = vmatprep.subr.mxu0 0.0
    %198 = vmatpush1.msra.mxu0 0.0
    %199 = vmatprep.subr.mxu0 0.0
    %200 = vmatpush1.msra.mxu0 0.0
    %201 = vmatprep.subr.mxu0 0.0
    %202 = vmatpush1.msra.mxu0 0.0
    %203 = vmatprep.subr.mxu0 0.0
    %204 = vmatpush1.msra.mxu0 0.0
    %205 = vmatprep.subr.mxu0 0.0
    %206 = vmatpush1.msra.mxu0 0.0
    %207 = vmatprep.subr.mxu0 0.0
    %208 = vmatpush1.msra.mxu0 0.0
    %209 = vmatprep.subr.mxu0 0.0
    %210 = vmatpush1.msra.mxu0 0.0
    %211 = vmatprep.subr.mxu0 0.0
    %212 = vmatpush1.msra.mxu0 0.0
    %213 = vmatprep.subr.mxu0 0.0
    %214 = vmatpush1.msra.mxu0 0.0
    %215 = vmatprep.subr.mxu0 0.0
    %216 = vmatpush1.msra.mxu0 0.0
    %217 = vmatprep.subr.mxu0 0.0
    %218 = vmatpush1.msra.mxu0 0.0
    %219 = vmatprep.subr.mxu0 0.0
    %220 = vmatpush1.msra.mxu0 0.0
    %221 = vmatprep.subr.mxu0 0.0
    %222 = vmatpush1.msra.mxu0 0.0
    %223 = vmatprep.subr.mxu0 0.0
    %224 = vmatpush1.msra.mxu0 0.0
    %225 = vmatprep.subr.mxu0 0.0
    %226 = vmatpush1.msra.mxu0 0.0
    %227 = vmatprep.subr.mxu0 0.0
    %228 = vmatpush1.msra.mxu0 0.0
    %229 = vmatprep.subr.mxu0 0.0
    %230 = vmatpush1.msra.mxu0 0.0
    %231 = vmatprep.subr.mxu0 0.0
    %232 = vmatpush1.msra.mxu0 0.0
    %233 = vmatprep.subr.mxu0 0.0
    %234 = vmatpush1.msra.mxu0 0.0
    %235 = vmatprep.subr.mxu0 0.0
    %236 = vmatpush1.msra.mxu0 0.0
    %237 = vmatprep.subr.mxu0 0.0
    %238 = vmatpush1.msra.mxu0 0.0
    %239 = vmatprep.subr.mxu0 0.0
    %240 = vmatpush1.msra.mxu0 0.0
    %241 = vmatprep.subr.mxu0 0.0
    %242 = vmatpush1.msra.mxu0 0.0
    %243 = vmatprep.subr.mxu0 0.0
    %244 = vmatpush1.msra.mxu0 0.0
    %245 = vmatprep.subr.mxu0 0.0
    %246 = vmatpush1.msra.mxu0 0.0
    %247 = vmatprep.subr.mxu0 0.0
    %248 = vmatpush1.msra.mxu0 0.0
    %249 = vmatprep.mubr.f32.mxu0 0.0
    %250 = vmatmul.mubr.f32.gmra.mrb[0].mxu0 %v180
    %v251 = vpop.f32.mrb[0].mxu0
    %v252 = vadd.f32 %v176, %v251
    %v253 = vpop.f32.mrb[0].mxu0
    %254 = vmatprep.mubr.f32.mxu0 0.0
    %255 = vmatmul.mubr.f32.gmra.mrb[0].mxu0 %v183
    %v256 = vpop.f32.mrb[0].mxu0
    %v257 = vadd.f32 %v176, %v256
    %v258 = vpop.f32.mrb[0].mxu0
    %259 = vdwg.mxu0
    %260 = vst [vmem:[#allocation9] sm:$0xff] %v252
    %261 = vst [vmem:[#allocation9 + $0x8] sm:$0xff] %v257
    // Predicated region
    $region38: #{tpu_custom_call.1} parent=1 // pred_check
      _
    $region39: #{tpu_custom_call.1} parent=1 // pred_check_branch
      %263 = sbr.rel (0) target = $region41
    $region40: #{tpu_custom_call.1} parent=1 // pred_region
      %s265 = ssub.s32 256, 256
      %266 = vsyncadd [#allocation5], %s265
      %s267 = sshll.u32 [#allocation9], 4
      %s268 = int_to_ptr.vmem [resolvable:$true] %s267
      %273 = dma.vmem_to_hbm [thread:$0]  %s268, 256, %s5, [#allocation5], 128, 128, 8
    $region41: #{tpu_custom_call.1} parent=1 // pred_fallthru
      _
    // Predicated region
    $region42: #{tpu_custom_call.1} parent=1 // pred_check
      _
    $region43: #{tpu_custom_call.1} parent=1 // pred_check_branch
      %275 = sbr.rel (0) target = $region45
    $region44: #{tpu_custom_call.1} parent=1 // pred_region
      %276 = dma.done [#allocation5], 256
    $region45: #{tpu_custom_call.1} parent=1 // pred_fallthru
      _
    %277 = vsyncpa [#allocation4], 1
    %278 = vsyncpa [#allocation7], 1
    %279 = vsyncpa [#allocation5], 1

</llo_original>
